<compile_context>
chip_gen: v7x
topology: tpu7x:2x2x1
jax: 0.10.0
libtpu: 0.0.40
codegen_flags: <defaults>
</compile_context>

<pallas_src>
import functools

import jax
import jax.numpy as jnp
from jax.experimental import pallas as pl
from jax.experimental.pallas import tpu as pltpu


def _round_up(x, m):
    return (x + m - 1) // m * m


# ----------------------------------------------------------------------------
# Kernels
# ----------------------------------------------------------------------------
def _flat_kernel(x_ref, w1_ref, b1_ref, w2_ref, b2_ref, o_ref):
    # x_ref: (tm, patch_dim)      w1_ref: (patch_dim, d_model)
    # b1_ref/b2_ref: (1, d_model) f32    w2_ref: (d_model, d_model)
    # o_ref: (tm, d_model)
    xv = x_ref[...].astype(w1_ref.dtype)              # cast after DMA (free on VPU)
    h = jnp.dot(xv, w1_ref[...], preferred_element_type=jnp.float32)
    h = jnp.maximum(h + b1_ref[...], 0.0)             # bias + ReLU in f32
    o = jnp.dot(h.astype(w2_ref.dtype), w2_ref[...],
                preferred_element_type=jnp.float32)
    o_ref[...] = (o + b2_ref[...]).astype(o_ref.dtype)


def _multi_channel_kernel(x_ref, w1_ref, b1_ref, w2_ref, b2_ref, o_ref, *,
                          n_channels):
    # x_ref: (C, tn, L)    w1_ref: (C, L, d_model)   o_ref: (tn, d_model)
    # h[m, d] = sum_c x[c, m, :] @ W1_c  ==  rearranged-patch @ W1
    h = jnp.dot(x_ref[0].astype(w1_ref.dtype), w1_ref[0],
                preferred_element_type=jnp.float32)
    for c in range(1, n_channels):                     # static, unrolled (C small)
        h = h + jnp.dot(x_ref[c].astype(w1_ref.dtype), w1_ref[c],
                        preferred_element_type=jnp.float32)
    h = jnp.maximum(h + b1_ref[...], 0.0)
    o = jnp.dot(h.astype(w2_ref.dtype), w2_ref[...],
                preferred_element_type=jnp.float32)
    o_ref[...] = (o + b2_ref[...]).astype(o_ref.dtype)


# ----------------------------------------------------------------------------
# Wrapper
# ----------------------------------------------------------------------------
def patch_encoder_pallas(x, w1, b1, w2, b2, *, patch_len,
                         compute_dtype=jnp.bfloat16, out_dtype=None):
    """x: (B, C, T), T = N * patch_len.  Returns (B, N, d_model).

    compute_dtype: MXU operand dtype (default bf16; f32 accumulation always).
    out_dtype: output dtype (default x.dtype; pass bf16 to halve output traffic).
    """
    B, C, T = x.shape
    assert T % patch_len == 0, (T, patch_len)
    L = patch_len
    N = T // L
    patch_dim = L * C
    d_model = w1.shape[1]
    out_dtype = x.dtype if out_dtype is None else out_dtype
    compute_dtype = x.dtype if compute_dtype is None else compute_dtype

    # Weights/biases are tiny; cast once at trace time.
    w1c = w1.astype(compute_dtype)
    w2c = w2.astype(compute_dtype)
    b1_2d = b1.reshape(1, d_model).astype(jnp.float32)
    b2_2d = b2.reshape(1, d_model).astype(jnp.float32)

    in_bytes = jnp.dtype(x.dtype).itemsize
    out_bytes = jnp.dtype(out_dtype).itemsize
    w_bytes = jnp.dtype(compute_dtype).itemsize
    # Worst case double-buffered footprint is ~5 MiB (tm=4096, f32 out); 32 MiB
    # is generous headroom and raises v5e's 16 MiB default scoped limit.
    vmem_limit = 32 * 1024 * 1024

    M = B * N
    cost = pl.CostEstimate(
        flops=2 * M * (patch_dim + d_model) * d_model,
        transcendentals=0,
        bytes_accessed=(M * patch_dim * in_bytes               # x read
                        + M * d_model * out_bytes              # output write (dominant)
                        + (patch_dim * d_model + d_model * d_model) * w_bytes
                        + 2 * d_model * 4),
    )

    if C == 1:
        # 'b c (n l) -> b n (l c)' is a pure reshape when C == 1.
        xp = x.reshape(M, patch_dim)

        # Sublane packing of the DMA'd tiles: 8 rows for f32, 16 bf16, 32 int8.
        pack = 32 // min(in_bytes, out_bytes)
        if M >= 512:
            # Big row tiles (multiple of 256, cap 4096 — sweepable) while keeping
            # >= 2 grid steps so both v7x TensorCores get work.
            tm = min(4096, max(256, _round_up(pl.cdiv(M, 2), 256)))
        else:
            tm = _round_up(max(M, pack), pack)
        grid = (pl.cdiv(M, tm),)   # non-divisible edge block is masked by Pallas

        out_flat = pl.pallas_call(
            _flat_kernel,
            out_shape=jax.ShapeDtypeStruct((M, d_model), out_dtype),
            grid_spec=pltpu.PrefetchScalarGridSpec(
                num_scalar_prefetch=0,
                grid=grid,
                in_specs=[
                    pl.BlockSpec((tm, patch_dim), lambda i: (i, 0)),       # patches
                    pl.BlockSpec((patch_dim, d_model), lambda i: (0, 0)),  # W1
                    pl.BlockSpec((1, d_model), lambda i: (0, 0)),          # b1
                    pl.BlockSpec((d_model, d_model), lambda i: (0, 0)),    # W2
                    pl.BlockSpec((1, d_model), lambda i: (0, 0)),          # b2
                ],
                out_specs=pl.BlockSpec((tm, d_model), lambda i: (i, 0)),
            ),
            compiler_params=pltpu.CompilerParams(
                dimension_semantics=("parallel",),
                vmem_limit_bytes=vmem_limit),
            cost_estimate=cost,
        )(xp, w1c, b1_2d, w2c, b2_2d)
        return out_flat.reshape(B, N, d_model)

    # ---- C > 1: no wrapper transpose, per-channel accumulation in-kernel ----
    # x viewed as (B, C, N, L) (free reshape); W1 rows permuted once so that
    # W1_perm[c] multiplies channel c's (L,) slice of every patch.
    x4 = x.reshape(B, C, N, L)
    w1_perm = w1c.reshape(L, C, d_model).transpose(1, 0, 2)    # (C, L, d_model)

    tn = N if N <= 1024 else 1024
    grid = (B, pl.cdiv(N, tn))

    kernel = functools.partial(_multi_channel_kernel, n_channels=C)
    out = pl.pallas_call(
        kernel,
        out_shape=jax.ShapeDtypeStruct((B, N, d_model), out_dtype),
        grid_spec=pltpu.PrefetchScalarGridSpec(
            num_scalar_prefetch=0,
            grid=grid,
            in_specs=[
                pl.BlockSpec((None, C, tn, L), lambda b, i: (b, 0, i, 0)),   # x
                pl.BlockSpec((C, L, d_model), lambda b, i: (0, 0, 0)),       # W1 perm
                pl.BlockSpec((1, d_model), lambda b, i: (0, 0)),             # b1
                pl.BlockSpec((d_model, d_model), lambda b, i: (0, 0)),       # W2
                pl.BlockSpec((1, d_model), lambda b, i: (0, 0)),             # b2
            ],
            out_specs=pl.BlockSpec((None, tn, d_model), lambda b, i: (b, i, 0)),
        ),
        compiler_params=pltpu.CompilerParams(
            dimension_semantics=("parallel", "parallel"),
            vmem_limit_bytes=vmem_limit),
        cost_estimate=cost,
    )(x4, w1_perm, b1_2d, w2c, b2_2d)
    return out


# ----------------------------------------------------------------------------
# Pure-JAX reference (mirrors the PyTorch forward)
# ----------------------------------------------------------------------------
def patch_encoder_reference(x, w1, b1, w2, b2, *, patch_len):
    B, C, T = x.shape
    N = T // patch_len
    xp = x.reshape(B, C, N, patch_len)
    xp = jnp.transpose(xp, (0, 2, 3, 1)).reshape(B, N, patch_len * C)
    h = jnp.maximum(xp @ w1 + b1, 0.0)
    return h @ w2 + b2


if __name__ == "__main__":
    patch_len = 16
    d_model = 128

    def make_params(key, patch_dim):
        kw1, kb1, kw2, kb2 = jax.random.split(key, 4)
        s1 = 1.0 / float(patch_dim) ** 0.5
        s2 = 1.0 / float(d_model) ** 0.5
        w1 = jax.random.uniform(kw1, (patch_dim, d_model), jnp.float32, -s1, s1)
        b1 = jax.random.uniform(kb1, (d_model,), jnp.float32, -s1, s1)
        w2 = jax.random.uniform(kw2, (d_model, d_model), jnp.float32, -s2, s2)
        b2 = jax.random.uniform(kb2, (d_model,), jnp.float32, -s2, s2)
        return w1, b1, w2, b2

    key = jax.random.PRNGKey(0)
    kx1, kp1, kx2, kp2, kx3, kp3 = jax.random.split(key, 6)

    # Case 1: module defaults (in_channel=1), default bf16 compute path.
    B, C, N = 2, 1, 8
    x = jax.random.normal(kx1, (B, C, N * patch_len), dtype=jnp.float32)
    w1, b1, w2, b2 = make_params(kp1, patch_len * C)
    fn = jax.jit(functools.partial(patch_encoder_pallas, patch_len=patch_len))
    out = jax.block_until_ready(fn(x, w1, b1, w2, b2))
    ref = patch_encoder_reference(x, w1, b1, w2, b2, patch_len=patch_len)
    assert out.shape == (B, N, d_model), out.shape
    assert jnp.allclose(out, ref, atol=2e-2, rtol=2e-2), "case1 (bf16) mismatch"

    # Case 2: ragged M (B*N=21, not a multiple of the row tile) with exact f32
    # compute — exercises the masked edge block (no jnp.pad / output slice).
    B, C, N = 3, 1, 7
    x = jax.random.normal(kx2, (B, C, N * patch_len), dtype=jnp.float32)
    w1, b1, w2, b2 = make_params(kp2, patch_len * C)
    fn32 = jax.jit(functools.partial(patch_encoder_pallas, patch_len=patch_len,
                                     compute_dtype=jnp.float32))
    out = jax.block_until_ready(fn32(x, w1, b1, w2, b2))
    ref = patch_encoder_reference(x, w1, b1, w2, b2, patch_len=patch_len)
    assert out.shape == (B, N, d_model), out.shape
    assert jnp.allclose(out, ref, atol=1e-4, rtol=1e-4), "case2 (f32 ragged) mismatch"

    # Case 3: multi-channel (C=4) — in-kernel per-channel accumulation, no
    # wrapper transpose of x.
    B, C, N = 2, 4, 8
    x = jax.random.normal(kx3, (B, C, N * patch_len), dtype=jnp.float32)
    w1, b1, w2, b2 = make_params(kp3, patch_len * C)
    out = jax.block_until_ready(fn(x, w1, b1, w2, b2))
    ref = patch_encoder_reference(x, w1, b1, w2, b2, patch_len=patch_len)
    assert out.shape == (B, N, d_model), out.shape
    assert jnp.allclose(out, ref, atol=2e-2, rtol=2e-2), "case3 (C>1) mismatch"

    print("KERNEL_OK")
</pallas_src>

<mosaic_0001>
module attributes {stable_mosaic.version = 11 : i64} {
  func.func @_flat_kernel(%arg0: i32, %arg1: memref<16x16xf32, #tpu.memory_space<vmem>>, %arg2: memref<16x128xbf16, #tpu.memory_space<vmem>>, %arg3: memref<1x128xf32, #tpu.memory_space<vmem>>, %arg4: memref<128x128xbf16, #tpu.memory_space<vmem>>, %arg5: memref<1x128xf32, #tpu.memory_space<vmem>>, %arg6: memref<16x128xf32, #tpu.memory_space<vmem>>) attributes {dimension_semantics = [#tpu.dimension_semantics<parallel>], iteration_bounds = array<i64: 1>, scalar_prefetch = 0 : i64, scratch_operands = 0 : i64, tpu.core_type = #tpu.core_type<tc>, window_params = [{transform_indices = @transform_0, window_bounds = array<i64: 16, 16>}, {pipeline_mode = #tpu.pipeline_mode<synchronous>, transform_indices = @transform_1, window_bounds = array<i64: 16, 128>}, {pipeline_mode = #tpu.pipeline_mode<synchronous>, transform_indices = @transform_2, window_bounds = array<i64: 1, 128>}, {pipeline_mode = #tpu.pipeline_mode<synchronous>, transform_indices = @transform_3, window_bounds = array<i64: 128, 128>}, {pipeline_mode = #tpu.pipeline_mode<synchronous>, transform_indices = @transform_4, window_bounds = array<i64: 1, 128>}, {transform_indices = @transform_5, window_bounds = array<i64: 16, 128>}]} {
    %c0 = arith.constant 0 : index
    %c0_0 = arith.constant 0 : index
    %0 = vector.load %arg1[%c0, %c0_0] : memref<16x16xf32, #tpu.memory_space<vmem>>, vector<16x16xf32>
    %1 = arith.truncf %0 : vector<16x16xf32> to vector<16x16xbf16>
    %c0_1 = arith.constant 0 : index
    %c0_2 = arith.constant 0 : index
    %2 = vector.load %arg2[%c0_1, %c0_2] : memref<16x128xbf16, #tpu.memory_space<vmem>>, vector<16x128xbf16>
    %cst = arith.constant dense<0.000000e+00> : vector<16x128xf32>
    %3 = tpu.matmul %1, %2, %cst {dimension_numbers = #tpu.dot_dimension_numbers<[1], [0], [0], [1], [0, 0, 1, 1], [], []>} : vector<16x16xbf16>, vector<16x128xbf16>, vector<16x128xf32> -> vector<16x128xf32>
    %c0_3 = arith.constant 0 : index
    %c0_4 = arith.constant 0 : index
    %4 = vector.load %arg3[%c0_3, %c0_4] : memref<1x128xf32, #tpu.memory_space<vmem>>, vector<1x128xf32>
    %5 = vector.broadcast %4 : vector<1x128xf32> to vector<16x128xf32>
    %6 = arith.addf %3, %5 : vector<16x128xf32>
    %cst_5 = arith.constant 0.000000e+00 : f32
    %7 = vector.broadcast %cst_5 : f32 to vector<16x128xf32>
    %8 = arith.maximumf %6, %7 : vector<16x128xf32>
    %9 = arith.truncf %8 : vector<16x128xf32> to vector<16x128xbf16>
    %c0_6 = arith.constant 0 : index
    %c0_7 = arith.constant 0 : index
    %10 = vector.load %arg4[%c0_6, %c0_7] : memref<128x128xbf16, #tpu.memory_space<vmem>>, vector<128x128xbf16>
    %cst_8 = arith.constant dense<0.000000e+00> : vector<16x128xf32>
    %11 = tpu.matmul %9, %10, %cst_8 {dimension_numbers = #tpu.dot_dimension_numbers<[1], [0], [0], [1], [0, 0, 1, 1], [], []>} : vector<16x128xbf16>, vector<128x128xbf16>, vector<16x128xf32> -> vector<16x128xf32>
    %c0_9 = arith.constant 0 : index
    %c0_10 = arith.constant 0 : index
    %12 = vector.load %arg5[%c0_9, %c0_10] : memref<1x128xf32, #tpu.memory_space<vmem>>, vector<1x128xf32>
    %13 = vector.broadcast %12 : vector<1x128xf32> to vector<16x128xf32>
    %14 = arith.addf %11, %13 : vector<16x128xf32>
    %c0_11 = arith.constant 0 : index
    %c0_12 = arith.constant 0 : index
    %15 = vector.load %arg6[%c0_11, %c0_12] : memref<16x128xf32, #tpu.memory_space<vmem>>, vector<16x128xf32>
    tpu.vector_store %arg6[%c0_11, %c0_12], %14 {strides = array<i32>} : memref<16x128xf32, #tpu.memory_space<vmem>>, vector<16x128xf32>,
    return
  }
  func.func @transform_0(%arg0: i32) -> (i32, i32) {
    %c0_i32 = arith.constant 0 : i32
    %c0_i32_0 = arith.constant 0 : i32
    return %arg0, %c0_i32 : i32, i32
  }
  func.func @transform_1(%arg0: i32) -> (i32, i32) {
    %c0_i32 = arith.constant 0 : i32
    %c0_i32_0 = arith.constant 0 : i32
    %c0_i32_1 = arith.constant 0 : i32
    return %c0_i32, %c0_i32_0 : i32, i32
  }
  func.func @transform_2(%arg0: i32) -> (i32, i32) {
    %c0_i32 = arith.constant 0 : i32
    %c0_i32_0 = arith.constant 0 : i32
    %c0_i32_1 = arith.constant 0 : i32
    return %c0_i32, %c0_i32_0 : i32, i32
  }
  func.func @transform_3(%arg0: i32) -> (i32, i32) {
    %c0_i32 = arith.constant 0 : i32
    %c0_i32_0 = arith.constant 0 : i32
    %c0_i32_1 = arith.constant 0 : i32
    return %c0_i32, %c0_i32_0 : i32, i32
  }
  func.func @transform_4(%arg0: i32) -> (i32, i32) {
    %c0_i32 = arith.constant 0 : i32
    %c0_i32_0 = arith.constant 0 : i32
    %c0_i32_1 = arith.constant 0 : i32
    return %c0_i32, %c0_i32_0 : i32, i32
  }
  func.func @transform_5(%arg0: i32) -> (i32, i32) {
    %c0_i32 = arith.constant 0 : i32
    %c0_i32_0 = arith.constant 0 : i32
    return %arg0, %c0_i32 : i32, i32
  }
}

</mosaic_0001>

<llo_original>
// kernel: patch_encoder_pallas.1
$region0: #{patch_encoder_pallas.1}
  #allocation0 [shape = 'u32[]', space=smem, size = 0x4, offset = 0x4, fixed_abs, tag = 'smem constant byte address 0x4 - core index']
  #allocation1 [shape = 'u32[144,128]{1,0:T(1,128)}', space=vmem, size = 0x12000, scoped, tag = 'internal scratch']
  %s0 = inlined_call_operand.vmem [shape: f32[16,16], index: 0, kind: input, shape index: {}]
  %s1 = inlined_call_operand.vmem [shape: bf16[16,128], index: 1, kind: input, shape index: {}]
  %s2 = inlined_call_operand.vmem [shape: f32[1,128], index: 2, kind: input, shape index: {}]
  %s3 = inlined_call_operand.vmem [shape: bf16[128,128], index: 3, kind: input, shape index: {}]
  %s4 = inlined_call_operand.vmem [shape: f32[1,128], index: 4, kind: input, shape index: {}]
  %s5 = inlined_call_operand.hbm [shape: f32[16,128], index: 5, kind: output, shape index: {}]
  %s6 = sld [smem:[#allocation0]]
  $region30: #{patch_encoder_pallas.1} parent=0
    _
  %s8 = ssub.s32 1, %s6
  %s9 = scalar_select 0, %s8, %s6
  $region1: #{patch_encoder_pallas.1} parent=0
    #allocation2 [shape = 'u8[8192]{0}', space=vmem, size = 0x2000, scoped, tag = 'output window, operand 0, single buffered']
    #allocation3 [shape = 's32[1]{0}', space=sflag, size = 0x4, scoped, tag = 'scoped memory for patch_encoder_pallas.1']
    %10 = vsyncpa [#allocation3], 0
    // Predicated region
    $region2: #{patch_encoder_pallas.1} parent=1 // pred_check
      _
    $region3: #{patch_encoder_pallas.1} parent=1 // pred_check_branch
      %12 = sbr.rel (0) target = $region5
    $region4: #{patch_encoder_pallas.1} parent=1 // pred_region
      _
    $region5: #{patch_encoder_pallas.1} parent=1 // pred_fallthru
      _
    // Predicated region
    $region6: #{patch_encoder_pallas.1} parent=1 // pred_check
      _
    $region7: #{patch_encoder_pallas.1} parent=1 // pred_check_branch
      %14 = sbr.rel (0) target = $region9
    $region8: #{patch_encoder_pallas.1} parent=1 // pred_region
      _
    $region9: #{patch_encoder_pallas.1} parent=1 // pred_fallthru
      _
    // Predicated region
    $region10: #{patch_encoder_pallas.1} parent=1 // pred_check
      _
    $region11: #{patch_encoder_pallas.1} parent=1 // pred_check_branch
      %16 = sbr.rel (0) target = $region13
    $region12: #{patch_encoder_pallas.1} parent=1 // pred_region
      _
    $region13: #{patch_encoder_pallas.1} parent=1 // pred_fallthru
      _
    // Predicated region
    $region14: #{patch_encoder_pallas.1} parent=1 // pred_check
      _
    $region15: #{patch_encoder_pallas.1} parent=1 // pred_check_branch
      %18 = sbr.rel (0) target = $region17
    $region16: #{patch_encoder_pallas.1} parent=1 // pred_region
      _
    $region17: #{patch_encoder_pallas.1} parent=1 // pred_fallthru
      _
    // Predicated region
    $region18: #{patch_encoder_pallas.1} parent=1 // pred_check
      _
    $region19: #{patch_encoder_pallas.1} parent=1 // pred_check_branch
      %20 = sbr.rel (0) target = $region21
    $region20: #{patch_encoder_pallas.1} parent=1 // pred_region
      _
    $region21: #{patch_encoder_pallas.1} parent=1 // pred_fallthru
      _
    %v22 = vld [vmem:[%s0] sm:$0xff]
    %v23 = vld [vmem:[%s0 + $0x8] sm:$0xff]
    %v24 = vpack.c.bf16 %v23, %v22
    %v25 = vld [vmem:[%s1] sm:$0xf]
    %v26 = vld [vmem:[%s1 + $0x4] sm:$0xf]
    %v27 = vld [vmem:[%s2] sm:$0x1]
    %v29 = vlaneseq
    %v30 = vshrl.u32 %v29, 7
    %v31 = vsub.s32 0, %v30
    %v32 = vrot.slane %v27, %v31
    %v36 = vunpack.c.l.b16 %v25
    %v37 = vunpack.c.l.b16 %v26
    %v38 = vpack.c.b16 %v37, %v36
    %vm40 = vcmask 130048
    %v42 = vsel %vm40, %v24, 0
    %44 = vmatprep.subr.bf16.mxu0 0
    %45 = vmatpush1.bf16.msra.mxu0 %v38
    %46 = vmatprep.subr.bf16.mxu0 0
    %47 = vmatpush1.bf16.msra.mxu0 0
    %48 = vmatprep.subr.bf16.mxu0 0
    %49 = vmatpush1.bf16.msra.mxu0 0
    %50 = vmatprep.subr.bf16.mxu0 0
    %51 = vmatpush1.bf16.msra.mxu0 0
    %52 = vmatprep.subr.bf16.mxu0 0
    %53 = vmatpush1.bf16.msra.mxu0 0
    %54 = vmatprep.subr.bf16.mxu0 0
    %55 = vmatpush1.bf16.msra.mxu0 0
    %56 = vmatprep.subr.bf16.mxu0 0
    %57 = vmatpush1.bf16.msra.mxu0 0
    %58 = vmatprep.subr.bf16.mxu0 0
    %59 = vmatpush1.bf16.msra.mxu0 0
    %60 = vmatprep.subr.bf16.mxu0 0
    %61 = vmatpush1.bf16.msra.mxu0 0
    %62 = vmatprep.subr.bf16.mxu0 0
    %63 = vmatpush1.bf16.msra.mxu0 0
    %64 = vmatprep.subr.bf16.mxu0 0
    %65 = vmatpush1.bf16.msra.mxu0 0
    %66 = vmatprep.subr.bf16.mxu0 0
    %67 = vmatpush1.bf16.msra.mxu0 0
    %68 = vmatprep.subr.bf16.mxu0 0
    %69 = vmatpush1.bf16.msra.mxu0 0
    %70 = vmatprep.subr.bf16.mxu0 0
    %71 = vmatpush1.bf16.msra.mxu0 0
    %72 = vmatprep.subr.bf16.mxu0 0
    %73 = vmatpush1.bf16.msra.mxu0 0
    %74 = vmatprep.subr.bf16.mxu0 0
    %75 = vmatpush1.bf16.msra.mxu0 0
    %76 = vmatprep.mubr.bf16.mxu0 0
    %77 = vmatmul.mubr.bf16.gmra.mrb[0].mxu0 %v42
    %v78 = vpop.f32.mrb[0].mxu0
    %v79 = vadd.f32 %v32, %v78
    %v80 = vpop.f32.mrb[0].mxu0
    %v81 = vpop.f32.mrb[0].mxu0
    %v82 = vadd.f32 %v32, %v81
    %v83 = vpop.f32.mrb[0].mxu0
    %84 = vdwg.mxu0
    %v85 = vmax.f32 %v79, 0.0
    %v86 = vmax.f32 %v82, 0.0
    %v87 = vpack.c.bf16 %v86, %v85
    %v88 = vld [vmem:[%s3] sm:$0xf]
    %v89 = vld [vmem:[%s3 + $0x4] sm:$0xf]
    %v90 = vld [vmem:[%s3 + $0x8] sm:$0xf]
    %v91 = vld [vmem:[%s3 + $0xc] sm:$0xf]
    %v92 = vld [vmem:[%s3 + $0x10] sm:$0xf]
    %v93 = vld [vmem:[%s3 + $0x14] sm:$0xf]
    %v94 = vld [vmem:[%s3 + $0x18] sm:$0xf]
    %v95 = vld [vmem:[%s3 + $0x1c] sm:$0xf]
    %v96 = vld [vmem:[%s3 + $0x20] sm:$0xf]
    %v97 = vld [vmem:[%s3 + $0x24] sm:$0xf]
    %v98 = vld [vmem:[%s3 + $0x28] sm:$0xf]
    %v99 = vld [vmem:[%s3 + $0x2c] sm:$0xf]
    %v100 = vld [vmem:[%s3 + $0x30] sm:$0xf]
    %v101 = vld [vmem:[%s3 + $0x34] sm:$0xf]
    %v102 = vld [vmem:[%s3 + $0x38] sm:$0xf]
    %v103 = vld [vmem:[%s3 + $0x3c] sm:$0xf]
    %v104 = vld [vmem:[%s4] sm:$0x1]
    %v106 = vlaneseq
    %v107 = vshrl.u32 %v106, 7
    %v108 = vsub.s32 0, %v107
    %v109 = vrot.slane %v104, %v108
    %v127 = vunpack.c.l.b16 %v88
    %v128 = vunpack.c.l.b16 %v89
    %v129 = vunpack.c.l.b16 %v90
    %v130 = vunpack.c.l.b16 %v91
    %v131 = vunpack.c.l.b16 %v92
    %v132 = vunpack.c.l.b16 %v93
    %v133 = vunpack.c.l.b16 %v94
    %v134 = vunpack.c.l.b16 %v95
    %v135 = vunpack.c.l.b16 %v96
    %v136 = vunpack.c.l.b16 %v97
    %v137 = vunpack.c.l.b16 %v98
    %v138 = vunpack.c.l.b16 %v99
    %v139 = vunpack.c.l.b16 %v100
    %v140 = vunpack.c.l.b16 %v101
    %v141 = vunpack.c.l.b16 %v102
    %v142 = vunpack.c.l.b16 %v103
    %v143 = vpack.c.b16 %v128, %v127
    %v144 = vpack.c.b16 %v130, %v129
    %v145 = vpack.c.b16 %v132, %v131
    %v146 = vpack.c.b16 %v134, %v133
    %v147 = vpack.c.b16 %v136, %v135
    %v148 = vpack.c.b16 %v138, %v137
    %v149 = vpack.c.b16 %v140, %v139
    %v150 = vpack.c.b16 %v142, %v141
    %159 = vmatprep.subr.bf16.mxu0 0
    %160 = vmatpush1.bf16.msra.mxu0 %v143
    %161 = vmatprep.subr.bf16.mxu0 0
    %162 = vmatpush1.bf16.msra.mxu0 %v144
    %163 = vmatprep.subr.bf16.mxu0 0
    %164 = vmatpush1.bf16.msra.mxu0 %v145
    %165 = vmatprep.subr.bf16.mxu0 0
    %166 = vmatpush1.bf16.msra.mxu0 %v146
    %167 = vmatprep.subr.bf16.mxu0 0
    %168 = vmatpush1.bf16.msra.mxu0 %v147
    %169 = vmatprep.subr.bf16.mxu0 0
    %170 = vmatpush1.bf16.msra.mxu0 %v148
    %171 = vmatprep.subr.bf16.mxu0 0
    %172 = vmatpush1.bf16.msra.mxu0 %v149
    %173 = vmatprep.subr.bf16.mxu0 0
    %174 = vmatpush1.bf16.msra.mxu0 %v150
    %175 = vmatprep.subr.bf16.mxu0 0
    %176 = vmatpush1.bf16.msra.mxu0 0
    %177 = vmatprep.subr.bf16.mxu0 0
    %178 = vmatpush1.bf16.msra.mxu0 0
    %179 = vmatprep.subr.bf16.mxu0 0
    %180 = vmatpush1.bf16.msra.mxu0 0
    %181 = vmatprep.subr.bf16.mxu0 0
    %182 = vmatpush1.bf16.msra.mxu0 0
    %183 = vmatprep.subr.bf16.mxu0 0
    %184 = vmatpush1.bf16.msra.mxu0 0
    %185 = vmatprep.subr.bf16.mxu0 0
    %186 = vmatpush1.bf16.msra.mxu0 0
    %187 = vmatprep.subr.bf16.mxu0 0
    %188 = vmatpush1.bf16.msra.mxu0 0
    %189 = vmatprep.subr.bf16.mxu0 0
    %190 = vmatpush1.bf16.msra.mxu0 0
    %191 = vmatprep.mubr.bf16.mxu0 0
    %192 = vmatmul.mubr.bf16.gmra.mrb[0].mxu0 %v87
    %v193 = vpop.f32.mrb[0].mxu0
    %v194 = vadd.f32 %v109, %v193
    %v195 = vpop.f32.mrb[0].mxu0
    %v196 = vpop.f32.mrb[0].mxu0
    %v197 = vadd.f32 %v109, %v196
    %v198 = vpop.f32.mrb[0].mxu0
    %199 = vdwg.mxu0
    %200 = vst [vmem:[#allocation2] sm:$0xff] %v194
    %201 = vst [vmem:[#allocation2 + $0x8] sm:$0xff] %v197
    // Predicated region
    $region22: #{patch_encoder_pallas.1} parent=1 // pred_check
      _
    $region23: #{patch_encoder_pallas.1} parent=1 // pred_check_branch
      %203 = sbr.rel (0) target = $region25
    $region24: #{patch_encoder_pallas.1} parent=1 // pred_region
      %s205 = ssub.s32 256, 256
      %206 = vsyncadd [#allocation3], %s205
      %s207 = sshll.u32 [#allocation2], 4
      %s208 = int_to_ptr.vmem [resolvable:$true] %s207
      %213 = dma.vmem_to_hbm [thread:$0]  %s208, 256, %s5, [#allocation3], 128, 128, 8
    $region25: #{patch_encoder_pallas.1} parent=1 // pred_fallthru
      _
    // Predicated region
    $region26: #{patch_encoder_pallas.1} parent=1 // pred_check
      _
    $region27: #{patch_encoder_pallas.1} parent=1 // pred_check_branch
      %215 = sbr.rel (0) target = $region29
    $region28: #{patch_encoder_pallas.1} parent=1 // pred_region
      %216 = dma.done [#allocation3], 256
    $region29: #{patch_encoder_pallas.1} parent=1 // pred_fallthru
      _
    %217 = vsyncpa [#allocation3], 1

</llo_original>
